<compile_context>
chip_gen: v7x
topology: tpu7x:2x2x1
jax: 0.10.0
libtpu: 0.0.40
codegen_flags: <defaults>
</compile_context>

<pallas_src>
import math

import jax
import jax.numpy as jnp
import numpy as np
from jax.experimental import pallas as pl
from jax.experimental.pallas import tpu as pltpu

_LANE = 128
_VMEM_LIMIT = 48 * 1024 * 1024      # explicit scoped-VMEM limit, < v7x's 64 MiB physical
_VMEM_BUDGET = 40 * 1024 * 1024     # target working set when choosing the row tile


def _round_up(x, m):
    return (x + m - 1) // m * m


def _pad_to(x, shape):
    x = jnp.asarray(x)
    pads = [(0, t - s) for s, t in zip(x.shape, shape)]
    if any(p[1] for p in pads):
        x = jnp.pad(x, pads)
    return x


def _choose_row_tile(n_nodes, n_h_pad, n_fts=2, budget_bytes=_VMEM_BUDGET):
    """N is padded only to a lane multiple (adj padding is quadratic in N_pad, so keep it
    minimal); the row tile TM is the largest of {1024,512,256,128} that divides N_pad and
    keeps double-buffered bf16 adj tiles + resident bf16 fts + f32 epilogue scratch under
    the (v7x-safe) VMEM budget."""
    if n_nodes <= _LANE:
        tm = _round_up(max(n_nodes, 8), 8)      # single row tile == whole padded graph
        return tm, tm
    n_pad = _round_up(n_nodes, _LANE)
    for tm in (1024, 512, 256, 128):
        if n_pad % tm:
            continue
        est = (2 * tm * n_pad * 2                    # 2 x bf16 adj row-tile buffers
               + 2 * n_fts * n_pad * n_h_pad * 2     # resident bf16 fts (2 bufs each)
               + 2 * n_fts * tm * n_h_pad * 4        # f32 h tiles + epilogue slack
               + 4 * tm * 4)                         # f32 score output blocks
        if est <= budget_bytes:
            return tm, n_pad
    return 128, n_pad


# ----------------------------------------------------------------------------
# Kernel 1: projection  fts = seq @ W^T   (hoisted, every distinct seq in one call)
# ----------------------------------------------------------------------------
def _proj_kernel(seq_ref, wt_ref, fts_ref):
    fts_ref[...] = jnp.dot(
        seq_ref[...], wt_ref[...], preferred_element_type=jnp.float32
    ).astype(fts_ref.dtype)


def project(seq_p, wt_p, tm):
    B, n_p, fin_p = seq_p.shape
    n_h_p = wt_p.shape[1]
    itm = seq_p.dtype.itemsize
    return pl.pallas_call(
        _proj_kernel,
        out_shape=jax.ShapeDtypeStruct((B, n_p, n_h_p), seq_p.dtype),
        grid=(B, n_p // tm),
        in_specs=[
            pl.BlockSpec((None, tm, fin_p), lambda b, r: (b, r, 0)),
            pl.BlockSpec((fin_p, n_h_p), lambda b, r: (0, 0)),
        ],
        out_specs=pl.BlockSpec((None, tm, n_h_p), lambda b, r: (b, r, 0)),
        compiler_params=pltpu.CompilerParams(
            dimension_semantics=("parallel", "parallel"),
            vmem_limit_bytes=_VMEM_LIMIT),
        cost_estimate=pl.CostEstimate(
            flops=2 * B * n_p * fin_p * n_h_p,
            transcendentals=0,
            bytes_accessed=(B * n_p * fin_p + fin_p * n_h_p + B * n_p * n_h_p) * itm),
    )(seq_p, wt_p)


# ----------------------------------------------------------------------------
# Kernel 2: row-tiled GCN aggregation fused with AvgReadout(mean) + Sigmoid.
#           h_1 / h_3 are never written to HBM -- only c = sigmoid(mean(h)) is emitted.
# ----------------------------------------------------------------------------
def _make_gcn_readout_kernel(tm, n_true):
    inv_n = 1.0 / float(n_true)

    def kernel(adj_ref, fts_ref, b_ref, alpha_ref, c_ref, acc_ref):
        r = pl.program_id(1)

        @pl.when(r == 0)
        def _():
            acc_ref[...] = jnp.zeros_like(acc_ref)

        # h_tile = PReLU(adj_tile @ fts + bias)   (bf16 MXU inputs, f32 accumulation)
        h = jnp.dot(adj_ref[...], fts_ref[...],
                    preferred_element_type=jnp.float32) + b_ref[...]
        a = alpha_ref[0]
        h = jnp.where(h > 0.0, h, a * h)

        # mask padded node rows, then accumulate column sums for the mean readout
        row = r * tm + jax.lax.broadcasted_iota(jnp.int32, (tm, 1), 0)
        h = jnp.where(row < n_true, h, 0.0)
        acc_ref[...] += jnp.sum(h, axis=0, keepdims=True)

        @pl.when(r == pl.num_programs(1) - 1)
        def _():
            c_ref[...] = jax.nn.sigmoid(acc_ref[...] * inv_n)

    return kernel


def gcn_readout(adj_p, fts_p, bias_p, alpha1, n_true, tm):
    B, n_p, _ = adj_p.shape
    n_h_p = fts_p.shape[-1]
    itm = adj_p.dtype.itemsize
    return pl.pallas_call(
        _make_gcn_readout_kernel(tm, n_true),
        out_shape=jax.ShapeDtypeStruct((B, 1, n_h_p), jnp.float32),
        grid=(B, n_p // tm),
        in_specs=[
            pl.BlockSpec((None, tm, n_p), lambda b, r: (b, r, 0)),       # adj row tile
            pl.BlockSpec((None, n_p, n_h_p), lambda b, r: (b, 0, 0)),    # resident fts
            pl.BlockSpec((1, n_h_p), lambda b, r: (0, 0)),               # GCN bias
            pl.BlockSpec(memory_space=pltpu.MemorySpace.SMEM),           # PReLU alpha
        ],
        out_specs=pl.BlockSpec((None, 1, n_h_p), lambda b, r: (b, 0, 0)),
        scratch_shapes=[pltpu.VMEM((1, n_h_p), jnp.float32)],
        compiler_params=pltpu.CompilerParams(
            dimension_semantics=("parallel", "arbitrary"),
            vmem_limit_bytes=_VMEM_LIMIT),
        cost_estimate=pl.CostEstimate(
            flops=2 * B * n_p * n_p * n_h_p,
            transcendentals=B * n_h_p,
            bytes_accessed=(B * n_p * n_p + B * n_p * n_h_p) * itm + B * n_h_p * 4),
    )(adj_p, fts_p, bias_p, alpha1)


# ----------------------------------------------------------------------------
# Kernel 2b: dual readout sharing ONE adjacency ('mask' aug: h_1 and h_3 both use adj).
#            Single pass over adj produces both c_1 and c_3.
# ----------------------------------------------------------------------------
def _make_dual_readout_kernel(tm, n_true):
    inv_n = 1.0 / float(n_true)

    def kernel(adj_ref, fts1_ref, fts2_ref, b_ref, alpha_ref,
               c1_ref, c3_ref, acc1_ref, acc3_ref):
        r = pl.program_id(1)

        @pl.when(r == 0)
        def _():
            acc1_ref[...] = jnp.zeros_like(acc1_ref)
            acc3_ref[...] = jnp.zeros_like(acc3_ref)

        a = alpha_ref[0]
        adj = adj_ref[...]
        b = b_ref[...]
        row = r * tm + jax.lax.broadcasted_iota(jnp.int32, (tm, 1), 0)
        rmask = row < n_true

        def accumulate(fts, acc_ref):
            h = jnp.dot(adj, fts, preferred_element_type=jnp.float32) + b
            h = jnp.where(h > 0.0, h, a * h)
            h = jnp.where(rmask, h, 0.0)
            acc_ref[...] += jnp.sum(h, axis=0, keepdims=True)

        accumulate(fts1_ref[...], acc1_ref)
        accumulate(fts2_ref[...], acc3_ref)

        @pl.when(r == pl.num_programs(1) - 1)
        def _():
            c1_ref[...] = jax.nn.sigmoid(acc1_ref[...] * inv_n)
            c3_ref[...] = jax.nn.sigmoid(acc3_ref[...] * inv_n)

    return kernel


def gcn_dual_readout(adj_p, fts_a, fts_b, bias_p, alpha1, n_true, tm):
    B, n_p, _ = adj_p.shape
    n_h_p = fts_a.shape[-1]
    itm = adj_p.dtype.itemsize
    out = jax.ShapeDtypeStruct((B, 1, n_h_p), jnp.float32)
    return pl.pallas_call(
        _make_dual_readout_kernel(tm, n_true),
        out_shape=(out, out),
        grid=(B, n_p // tm),
        in_specs=[
            pl.BlockSpec((None, tm, n_p), lambda b, r: (b, r, 0)),       # shared adj tile
            pl.BlockSpec((None, n_p, n_h_p), lambda b, r: (b, 0, 0)),    # resident fts (h_1)
            pl.BlockSpec((None, n_p, n_h_p), lambda b, r: (b, 0, 0)),    # resident fts (h_3)
            pl.BlockSpec((1, n_h_p), lambda b, r: (0, 0)),               # GCN bias
            pl.BlockSpec(memory_space=pltpu.MemorySpace.SMEM),           # PReLU alpha
        ],
        out_specs=(pl.BlockSpec((None, 1, n_h_p), lambda b, r: (b, 0, 0)),
                   pl.BlockSpec((None, 1, n_h_p), lambda b, r: (b, 0, 0))),
        scratch_shapes=[pltpu.VMEM((1, n_h_p), jnp.float32),
                        pltpu.VMEM((1, n_h_p), jnp.float32)],
        compiler_params=pltpu.CompilerParams(
            dimension_semantics=("parallel", "arbitrary"),
            vmem_limit_bytes=_VMEM_LIMIT),
        cost_estimate=pl.CostEstimate(
            flops=4 * B * n_p * n_p * n_h_p,
            transcendentals=2 * B * n_h_p,
            bytes_accessed=(B * n_p * n_p + 2 * B * n_p * n_h_p) * itm
                           + 2 * B * n_h_p * 4),
    )(adj_p, fts_a, fts_b, bias_p, alpha1)


# ----------------------------------------------------------------------------
# Kernel 3: fused discriminator. h_0 and h_2 share the SAME adjacency, so ONE pass over
#           adj produces both score vectors; h_0 / h_2 are never written to HBM.
#           score{1,2}[n] = PReLU(adj@fts{1,2} + b)[n, :] . u + 2*bb,  u = Wb @ (c1 + c3)
# ----------------------------------------------------------------------------
def _dual_score_kernel(adj_ref, fts1_ref, fts2_ref, b_ref, u_ref, alpha_ref, bb_ref,
                       s1_ref, s2_ref):
    a = alpha_ref[0]
    two_bb = 2.0 * bb_ref[0]
    adj = adj_ref[...]
    b = b_ref[...]
    u = u_ref[...]

    def score(fts, s_ref):
        h = jnp.dot(adj, fts, preferred_element_type=jnp.float32) + b
        h = jnp.where(h > 0.0, h, a * h)
        # s[0, m] = sum_k u[0, k] * h[m, k]
        s = jax.lax.dot_general(u, h,
                                dimension_numbers=(((1,), (1,)), ((), ())),
                                preferred_element_type=jnp.float32)
        s_ref[...] = s + two_bb

    score(fts1_ref[...], s1_ref)
    score(fts2_ref[...], s2_ref)


def gcn_dual_score(adj_p, fts1_p, fts2_p, bias_p, u_p, alpha1, bb1, tm):
    B, n_p, _ = adj_p.shape
    n_h_p = fts1_p.shape[-1]
    itm = adj_p.dtype.itemsize
    out = jax.ShapeDtypeStruct((B, 1, n_p), jnp.float32)
    return pl.pallas_call(
        _dual_score_kernel,
        out_shape=(out, out),
        grid=(B, n_p // tm),
        in_specs=[
            pl.BlockSpec((None, tm, n_p), lambda b, r: (b, r, 0)),       # shared adj tile
            pl.BlockSpec((None, n_p, n_h_p), lambda b, r: (b, 0, 0)),    # resident fts1 (h_0)
            pl.BlockSpec((None, n_p, n_h_p), lambda b, r: (b, 0, 0)),    # resident fts2 (h_2)
            pl.BlockSpec((1, n_h_p), lambda b, r: (0, 0)),               # GCN bias
            pl.BlockSpec((None, 1, n_h_p), lambda b, r: (b, 0, 0)),      # u = Wb@(c1+c3)
            pl.BlockSpec(memory_space=pltpu.MemorySpace.SMEM),           # PReLU alpha
            pl.BlockSpec(memory_space=pltpu.MemorySpace.SMEM),           # bilinear bias
        ],
        out_specs=(pl.BlockSpec((None, 1, tm), lambda b, r: (b, 0, r)),
                   pl.BlockSpec((None, 1, tm), lambda b, r: (b, 0, r))),
        compiler_params=pltpu.CompilerParams(
            dimension_semantics=("parallel", "parallel"),
            vmem_limit_bytes=_VMEM_LIMIT),
        cost_estimate=pl.CostEstimate(
            flops=4 * B * n_p * n_p * n_h_p + 4 * B * n_p * n_h_p,
            transcendentals=0,
            bytes_accessed=(B * n_p * n_p + 2 * B * n_p * n_h_p) * itm + 2 * B * n_p * 4),
    )(adj_p, fts1_p, fts2_p, bias_p, u_p, alpha1, bb1)


# ----------------------------------------------------------------------------
# DGI forward (glue in plain JAX / Python control flow)
# ----------------------------------------------------------------------------
def dgi_forward(params, seq1, seq2, seq3, seq4, adj, aug_adj1, aug_adj2,
                sparse, msk, samp_bias1, samp_bias2, aug_type,
                compute_dtype=jnp.bfloat16):
    # TODO(synk): sparse spmm path (torch.spmm) not implemented; dense bmm only.
    assert not sparse
    # TODO(synk): msk-weighted readout (sum(seq*msk)/sum(msk)) not implemented; msk=None only.
    assert msk is None

    f32 = jnp.float32
    B, N, Fin = seq1.shape
    n_h = params["fc_w"].shape[0]
    fin_p = _round_up(Fin, _LANE)
    n_h_p = _round_up(n_h, _LANE)
    tm, n_p = _choose_row_tile(N, n_h_p)

    # Parameters: pad to lane-dense (x128) layouts; matmul operands in bf16.
    wt = _pad_to(jnp.asarray(params["fc_w"], f32).T, (fin_p, n_h_p)).astype(compute_dtype)
    bias = _pad_to(jnp.asarray(params["gcn_b"], f32).reshape(1, n_h), (1, n_h_p))
    wb = _pad_to(jnp.asarray(params["bil_w"], f32), (n_h_p, n_h_p))
    alpha1 = jnp.asarray(params["prelu_a"], f32).reshape(1)
    bb1 = jnp.asarray(params["bil_b"], f32).reshape(1)

    pad_seq = lambda s: _pad_to(jnp.asarray(s, f32), (B, n_p, fin_p)).astype(compute_dtype)
    pad_adj = lambda a: _pad_to(jnp.asarray(a, f32), (B, n_p, n_p)).astype(compute_dtype)

    # Hoisted projections: every distinct seq projected once, in a single pallas_call
    # (stacked along the batch axis); 'edge' reuses seq1's projection for h_0, h_1, h_3.
    if aug_type == "edge":
        seq_list = [seq1, seq2]
    elif aug_type in ("mask", "node", "subgraph"):
        seq_list = [seq1, seq2, seq3, seq4]
    else:
        raise AssertionError("unknown aug_type")
    fts_all = project(jnp.concatenate([pad_seq(s) for s in seq_list], axis=0), wt, tm)
    fts_list = jnp.split(fts_all, len(seq_list), axis=0)
    fts1, fts2 = fts_list[0], fts_list[1]

    adj_p = pad_adj(adj)

    # h_1 / h_3 are consumed only by the readout -> fused, never materialized.
    if aug_type == "edge":
        c_1 = gcn_readout(pad_adj(aug_adj1), fts1, bias, alpha1, N, tm)      # (B, 1, n_h_p)
        c_3 = gcn_readout(pad_adj(aug_adj2), fts1, bias, alpha1, N, tm)
    elif aug_type == "mask":
        # both readouts share adj -> one fused pass over it
        c_1, c_3 = gcn_dual_readout(adj_p, fts_list[2], fts_list[3], bias, alpha1, N, tm)
    else:  # node / subgraph
        c_1 = gcn_readout(pad_adj(aug_adj1), fts_list[2], bias, alpha1, N, tm)
        c_3 = gcn_readout(pad_adj(aug_adj2), fts_list[3], bias, alpha1, N, tm)

    # u = Wb @ (c1 + c3), all batches in one tiny XLA matmul (M=1 MXU dots avoided).
    csum = (c_1 + c_3)[:, 0, :]                                  # (B, n_h_p)
    u = jnp.einsum("bj,ij->bi", csum, wb)[:, None, :]            # (B, 1, n_h_p)

    # h_0 / h_2 are consumed only by the discriminator -> one fused pass over adj
    # produces both score vectors.
    sc1, sc2 = gcn_dual_score(adj_p, fts1, fts2, bias, u, alpha1, bb1, tm)
    sc1 = sc1[:, 0, :N]
    sc2 = sc2[:, 0, :N]

    if samp_bias1 is not None:
        sc1 = sc1 + 2.0 * samp_bias1
    if samp_bias2 is not None:
        sc2 = sc2 + 2.0 * samp_bias2
    return jnp.concatenate([sc1, sc2], axis=1)                   # (B, 2N)


# ----------------------------------------------------------------------------
# Pure-JAX reference (mirrors the PyTorch math with the same bf16 MXU casts).
# ----------------------------------------------------------------------------
def dgi_reference(params, seq1, seq2, seq3, seq4, adj, aug_adj1, aug_adj2, aug_type,
                  compute_dtype=jnp.bfloat16):
    cd = compute_dtype
    f32 = jnp.float32
    w = jnp.asarray(params["fc_w"], f32)
    b = jnp.asarray(params["gcn_b"], f32)
    alpha = jnp.asarray(params["prelu_a"], f32)
    wb = jnp.asarray(params["bil_w"], f32)
    bb = jnp.asarray(params["bil_b"], f32)
    wt = w.T.astype(cd)

    def gcn(seq, a):
        fts = jnp.einsum("bnf,fh->bnh", seq.astype(cd), wt,
                         preferred_element_type=f32).astype(cd)
        out = jnp.einsum("bij,bjh->bih", a.astype(cd), fts,
                         preferred_element_type=f32) + b
        return jnp.where(out > 0.0, out, alpha * out)

    def disc(c, hpl, hmi):
        u = c @ wb.T
        s1 = jnp.einsum("bnh,bh->bn", hpl, u) + bb
        s2 = jnp.einsum("bnh,bh->bn", hmi, u) + bb
        return jnp.concatenate([s1, s2], axis=1)

    h_0 = gcn(seq1, adj)
    if aug_type == "edge":
        h_1, h_3 = gcn(seq1, aug_adj1), gcn(seq1, aug_adj2)
    elif aug_type == "mask":
        h_1, h_3 = gcn(seq3, adj), gcn(seq4, adj)
    else:
        h_1, h_3 = gcn(seq3, aug_adj1), gcn(seq4, aug_adj2)
    c_1 = jax.nn.sigmoid(jnp.mean(h_1, axis=1))
    c_3 = jax.nn.sigmoid(jnp.mean(h_3, axis=1))
    h_2 = gcn(seq2, adj)
    return disc(c_1, h_0, h_2) + disc(c_3, h_0, h_2)


# ----------------------------------------------------------------------------
def _xavier_uniform(key, shape, fan_in, fan_out):
    bound = math.sqrt(6.0 / (fan_in + fan_out))
    return jax.random.uniform(key, shape, jnp.float32, -bound, bound)


def _make_inputs(keys, B, N, n_in):
    seq1 = jax.random.normal(keys[0], (B, N, n_in), jnp.float32)
    seq2 = jax.random.normal(keys[1], (B, N, n_in), jnp.float32)   # "shuffled" negatives
    seq3 = jax.random.normal(keys[2], (B, N, n_in), jnp.float32)
    seq4 = jax.random.normal(keys[3], (B, N, n_in), jnp.float32)
    adj = jax.random.uniform(keys[4], (B, N, N), jnp.float32)
    aug_adj1 = jax.random.uniform(keys[5], (B, N, N), jnp.float32)
    aug_adj2 = jax.random.uniform(keys[6], (B, N, N), jnp.float32)
    return seq1, seq2, seq3, seq4, adj, aug_adj1, aug_adj2


if __name__ == "__main__":
    n_in, n_h = 48, 96
    key = jax.random.PRNGKey(0)
    keys = jax.random.split(key, 16)

    # Parameters (mirrors GCN_DGI / Discriminator __init__).
    params = {
        "fc_w": _xavier_uniform(keys[0], (n_h, n_in), fan_in=n_in, fan_out=n_h),
        "gcn_b": jnp.zeros((n_h,), jnp.float32),
        "prelu_a": jnp.float32(0.25),                       # nn.PReLU default
        "bil_w": _xavier_uniform(keys[1], (n_h, n_h), fan_in=n_h * n_h, fan_out=n_h),
        "bil_b": jnp.float32(0.0),
    }

    # --- Test 1: 'edge' aug. N=500 -> N_pad=512, single 512-row tile, 12 masked rows;
    #     Fin=48 -> 128, n_h=96 -> 128. Exercises single readout + fused dual score.
    B, N = 2, 500
    ins = _make_inputs(keys[2:9], B, N, n_in)
    ret = dgi_forward(params, *ins, sparse=False, msk=None,
                      samp_bias1=None, samp_bias2=None, aug_type="edge")
    ret = jax.block_until_ready(ret)
    ref = dgi_reference(params, *ins, "edge")
    assert ret.shape == (B, 2 * N), ret.shape
    np.testing.assert_allclose(np.asarray(ret), np.asarray(ref), rtol=5e-3, atol=5e-3)

    # --- Test 2: 'mask' aug. N=300 -> N_pad=384, three 128-row tiles (multi-tile
    #     accumulation + row masking) and the shared-adj dual-readout kernel.
    B2, N2 = 2, 300
    ins2 = _make_inputs(keys[9:16], B2, N2, n_in)
    ret2 = dgi_forward(params, *ins2, sparse=False, msk=None,
                       samp_bias1=None, samp_bias2=None, aug_type="mask")
    ret2 = jax.block_until_ready(ret2)
    ref2 = dgi_reference(params, *ins2, "mask")
    assert ret2.shape == (B2, 2 * N2), ret2.shape
    np.testing.assert_allclose(np.asarray(ret2), np.asarray(ref2), rtol=5e-3, atol=5e-3)

    print("KERNEL_OK")
</pallas_src>

<mosaic_0001>
module attributes {stable_mosaic.version = 11 : i64} {
  func.func @_proj_kernel(%arg0: i32, %arg1: i32, %arg2: memref<1x512x128xbf16, #tpu.memory_space<vmem>>, %arg3: memref<128x128xbf16, #tpu.memory_space<vmem>>, %arg4: memref<1x512x128xbf16, #tpu.memory_space<vmem>>) attributes {dimension_semantics = [#tpu.dimension_semantics<parallel>, #tpu.dimension_semantics<parallel>], iteration_bounds = array<i64: 4, 1>, scalar_prefetch = 0 : i64, scratch_operands = 0 : i64, tpu.core_type = #tpu.core_type<tc>, window_params = [{transform_indices = @transform_0, window_bounds = array<i64: 1, 512, 128>}, {pipeline_mode = #tpu.pipeline_mode<synchronous>, transform_indices = @transform_1, window_bounds = array<i64: 128, 128>}, {transform_indices = @transform_2, window_bounds = array<i64: 1, 512, 128>}]} {
    %c0 = arith.constant 0 : index
    %c0_0 = arith.constant 0 : index
    %c0_1 = arith.constant 0 : index
    %0 = vector.load %arg2[%c0, %c0_0, %c0_1] : memref<1x512x128xbf16, #tpu.memory_space<vmem>>, vector<1x512x128xbf16>
    %1 = vector.shape_cast %0 : vector<1x512x128xbf16> to vector<512x128xbf16>
    %c0_2 = arith.constant 0 : index
    %c0_3 = arith.constant 0 : index
    %2 = vector.load %arg3[%c0_2, %c0_3] : memref<128x128xbf16, #tpu.memory_space<vmem>>, vector<128x128xbf16>
    %cst = arith.constant dense<0.000000e+00> : vector<512x128xf32>
    %3 = tpu.matmul %1, %2, %cst {dimension_numbers = #tpu.dot_dimension_numbers<[1], [0], [0], [1], [0, 0, 1, 1], [], []>} : vector<512x128xbf16>, vector<128x128xbf16>, vector<512x128xf32> -> vector<512x128xf32>
    %4 = arith.truncf %3 : vector<512x128xf32> to vector<512x128xbf16>
    %c0_4 = arith.constant 0 : index
    %c0_5 = arith.constant 0 : index
    %c0_6 = arith.constant 0 : index
    %5 = vector.load %arg4[%c0_4, %c0_5, %c0_6] : memref<1x512x128xbf16, #tpu.memory_space<vmem>>, vector<1x512x128xbf16>
    %6 = vector.shape_cast %5 : vector<1x512x128xbf16> to vector<512x128xbf16>
    %7 = vector.shape_cast %4 : vector<512x128xbf16> to vector<1x512x128xbf16>
    tpu.vector_store %arg4[%c0_4, %c0_5, %c0_6], %7 {strides = array<i32>} : memref<1x512x128xbf16, #tpu.memory_space<vmem>>, vector<1x512x128xbf16>,
    return
  }
  func.func @transform_0(%arg0: i32, %arg1: i32) -> (i32, i32, i32) {
    %c0_i32 = arith.constant 0 : i32
    %c0_i32_0 = arith.constant 0 : i32
    return %arg0, %arg1, %c0_i32 : i32, i32, i32
  }
  func.func @transform_1(%arg0: i32, %arg1: i32) -> (i32, i32) {
    %c0_i32 = arith.constant 0 : i32
    %c0_i32_0 = arith.constant 0 : i32
    %c0_i32_1 = arith.constant 0 : i32
    return %c0_i32, %c0_i32_0 : i32, i32
  }
  func.func @transform_2(%arg0: i32, %arg1: i32) -> (i32, i32, i32) {
    %c0_i32 = arith.constant 0 : i32
    %c0_i32_0 = arith.constant 0 : i32
    return %arg0, %arg1, %c0_i32 : i32, i32, i32
  }
}

</mosaic_0001>

<llo_original>
// kernel: tpu_custom_call.1
$region0: #{tpu_custom_call.1}
  #allocation0 [shape = 'u32[]', space=smem, size = 0x4, offset = 0x4, fixed_abs, tag = 'smem constant byte address 0x4 - core index']
  #allocation1 [shape = 'u32[144,128]{1,0:T(1,128)}', space=vmem, size = 0x12000, scoped, tag = 'internal scratch']
  %s0 = inlined_call_operand.hbm [shape: bf16[4,512,128], index: 0, kind: input, shape index: {}]
  %s1 = inlined_call_operand.hbm [shape: bf16[128,128], index: 1, kind: input, shape index: {}]
  %s2 = inlined_call_operand.hbm [shape: bf16[4,512,128], index: 2, kind: output, shape index: {}]
  %s3 = sld [smem:[#allocation0]]
  $region49: #{tpu_custom_call.1} parent=0
    _
  %s5 = ssub.s32 1, %s3
  %s6 = scalar_select 0, %s5, %s3
  $region1: #{tpu_custom_call.1} parent=0
    #allocation2 [shape = 'u8[262144]{0}', space=vmem, size = 0x40000, scoped, tag = 'input window, operand 0']
    #allocation3 [shape = 's32[2]{0}', space=sflag, size = 0x8, scoped, tag = 'scoped memory for tpu_custom_call.1']
    #allocation4 [shape = 's32[2]{0}', space=sflag, size = 0x8, scoped, tag = 'scoped memory for tpu_custom_call.1']
    #allocation5 [shape = 'u8[32768]{0}', space=vmem, size = 0x8000, scoped, tag = 'input window, operand 1, single buffered']
    #allocation6 [shape = 's32[1]{0}', space=sflag, size = 0x4, scoped, tag = 'scoped memory for tpu_custom_call.1']
    #allocation7 [shape = 'u8[262144]{0}', space=vmem, size = 0x40000, scoped, tag = 'output window, operand 0']
    %7 = vsyncpa [#allocation3], 0
    %s8 = scalar_lea.sflag [#allocation3], 1
    %9 = vsyncpa %s8, 0
    %10 = vsyncpa [#allocation6], 0
    %11 = vsyncpa [#allocation4], 0
    %s12 = scalar_lea.sflag [#allocation4], 1
    %13 = vsyncpa %s12, 0
    loop: start=0, step=1, limit=6
    $region2: #{tpu_custom_call.1} parent=1 // loop_pre_header
      _
    $region3: #{tpu_custom_call.1} parent=1 // loop_header
      %s15 = sphi 0, %s19
      %p16 = scmp.ge.s32.totalorder %s15, 6
      %s22 = sphi 0, %s34
      %s23 = sphi 0, %s30
      %s24 = sphi 0, %s22
      %s25 = sphi 0, %s23
      %s26 = sphi 0, %s24
      %s27 = sphi 0, %s25
      %s39 = sphi 0, %s41
      %s42 = sphi 0, %s39
      %s43 = sphi 0, %s42
      %s59 = sphi 0, %s43
      %s63 = sphi 0, %s63
      %s65 = sphi 0, %s63
      %s66 = sphi 0, %s65
      %s80 = sphi 0, %s66
      %s88 = sphi 0, %s90
      %s91 = sphi 0, %s88
      %s92 = sphi 0, %s91
      %s108 = sphi 0, %s92
    $region4: #{tpu_custom_call.1} parent=1 // loop_header_branch
      %18 = sbr.rel (%p16) target = $region8
    $region5: #{tpu_custom_call.1} parent=1 // loop_body
      %s20 = ssub.s32 %s15, 1
      %s21 = ssub.s32 %s15, 2
      %s28 = sadd.s32 1, %s23
      %p29 = scmp.ge.s32.totalorder %s28, 1
      %s30 = scalar_select %p29, 0, %s28
      %s31 = sadd.s32 1, %s22
      %s32 = scalar_select %p29, %s31, %s22
      %p33 = scmp.ge.s32.totalorder %s32, 4
      %s34 = scalar_select %p33, 0, %s32
      %s35 = ssub.s32 %s22, %s34
      %s36 = ssub.s32 %s23, %s30
      %s37 = sor.u32 %s35, %s36
      %p38 = scmp.eq.s32.totalorder %s37, 0
      %s40 = sadd.s32 %s39, 1
      %s41 = scalar_select %p38, %s39, %s40
      %p44 = pneg %p38
      %p45 = scmp.eq.s32.totalorder %s15, 3
      %p46 = por %p44, %p45
      %p47 = scmp.ne.s32.totalorder %s39, %s42
      %p48 = scmp.eq.s32.totalorder %s15, 0
      %p49 = por %p47, %p48
      %p50 = scmp.ne.s32.totalorder %s39, %s42
      %p51 = scmp.eq.s32.totalorder %s20, 3
      %p52 = por %p50, %p51
      %p53 = scmp.ne.s32.totalorder %s42, %s43
      %p54 = scmp.eq.s32.totalorder %s20, 0
      %p55 = por %p53, %p54
      %p56 = scmp.ne.s32.totalorder %s42, %s43
      %p57 = scmp.eq.s32.totalorder %s21, 3
      %p58 = por %p56, %p57
      %p60 = scmp.ne.s32.totalorder %s43, %s59
      %p61 = scmp.eq.s32.totalorder %s21, 0
      %p62 = por %p60, %p61
      %s64 = sadd.s32 %s63, 1
      %p67 = scmp.eq.s32.totalorder %s15, 3
      %p68 = scmp.ne.s32.totalorder %s63, %s65
      %p69 = scmp.eq.s32.totalorder %s15, 0
      %p70 = por %p68, %p69
      %p71 = scmp.ne.s32.totalorder %s63, %s65
      %p72 = scmp.eq.s32.totalorder %s20, 3
      %p73 = por %p71, %p72
      %p74 = scmp.ne.s32.totalorder %s65, %s66
      %p75 = scmp.eq.s32.totalorder %s20, 0
      %p76 = por %p74, %p75
      %p77 = scmp.ne.s32.totalorder %s65, %s66
      %p78 = scmp.eq.s32.totalorder %s21, 3
      %p79 = por %p77, %p78
      %p81 = scmp.ne.s32.totalorder %s66, %s80
      %p82 = scmp.eq.s32.totalorder %s21, 0
      %p83 = por %p81, %p82
      %s84 = ssub.s32 %s22, %s34
      %s85 = ssub.s32 %s23, %s30
      %s86 = sor.u32 %s84, %s85
      %p87 = scmp.eq.s32.totalorder %s86, 0
      %s89 = sadd.s32 %s88, 1
      %s90 = scalar_select %p87, %s88, %s89
      %p93 = pneg %p87
      %p94 = scmp.eq.s32.totalorder %s15, 3
      %p95 = por %p93, %p94
      %p96 = scmp.ne.s32.totalorder %s88, %s91
      %p97 = scmp.eq.s32.totalorder %s15, 0
      %p98 = por %p96, %p97
      %p99 = scmp.ne.s32.totalorder %s88, %s91
      %p100 = scmp.eq.s32.totalorder %s20, 3
      %p101 = por %p99, %p100
      %p102 = scmp.ne.s32.totalorder %s91, %s92
      %p103 = scmp.eq.s32.totalorder %s20, 0
      %p104 = por %p102, %p103
      %p105 = scmp.ne.s32.totalorder %s91, %s92
      %p106 = scmp.eq.s32.totalorder %s21, 3
      %p107 = por %p105, %p106
      %p109 = scmp.ne.s32.totalorder %s92, %s108
      %p110 = scmp.eq.s32.totalorder %s21, 0
      %p111 = por %p109, %p110
      %p112 = scmp.le.s32.totalorder 1, %s15
      %p113 = scmp.lt.s32.totalorder %s15, 5
      %p114 = pnand %p112, %p113
      %p115 = pneg %p114
      // Predicated region
      $region9: #{tpu_custom_call.1} parent=5 // pred_check
        _
      $region10: #{tpu_custom_call.1} parent=5 // pred_check_branch
        %117 = sbr.rel (%p114) target = $region12
      $region11: #{tpu_custom_call.1} parent=5 // pred_region
        %s118 = ssub.s32 %s15, 1
        // Predicated region
        $region13: #{tpu_custom_call.1} parent=11 // pred_check
          %p119 = pneg %p76
        $region14: #{tpu_custom_call.1} parent=11 // pred_check_branch
          %121 = sbr.rel (%p119) target = $region16
        $region15: #{tpu_custom_call.1} parent=11 // pred_region
          %s123 = ssub.s32 1024, 1024
          %124 = vsyncadd [#allocation6], %s123
          %s125 = sshll.u32 [#allocation5], 4
          %s126 = int_to_ptr.vmem [resolvable:$true] %s125
          %131 = dma.hbm_to_vmem [thread:$0]  %s1, 1024, %s126, [#allocation6], 64, 64, 4
        $region16: #{tpu_custom_call.1} parent=11 // pred_fallthru
          _
      $region12: #{tpu_custom_call.1} parent=5 // pred_fallthru
        _
      %p132 = scmp.lt.s32.totalorder %s15, 4
      // Predicated region
      $region17: #{tpu_custom_call.1} parent=5 // pred_check
        %p133 = pneg %p132
      $region18: #{tpu_custom_call.1} parent=5 // pred_check_branch
        %135 = sbr.rel (%p133) target = $region20
      $region19: #{tpu_custom_call.1} parent=5 // pred_region
        // Predicated region
        $region21: #{tpu_custom_call.1} parent=19 // pred_check
          %p136 = pneg %p49
        $region22: #{tpu_custom_call.1} parent=19 // pred_check_branch
          %138 = sbr.rel (%p136) target = $region24
        $region23: #{tpu_custom_call.1} parent=19 // pred_region
          %s139 = sand.u32 %s39, 1
          %s140 = scalar_lea.sflag [#allocation3], %s139
          %s141 = sand.u32 %s39, 1
          %s142 = smul.addr %s141, 256
          %s143 = scalar_lea.vmem [#allocation2], %s142
          %s144 = smul.u32 64, %s23
          %s146 = ssub.s32 4096, 4096
          %147 = vsyncadd %s140, %s146
          %s148 = smul.addr %s22, 64
          %s149 = sadd.s32 %s144, %s148
          %s150 = smul.addr %s149, 64
          %s151 = scalar_lea.hbm %s0, %s150
          %s152 = sshll.u32 %s143, 4
          %s153 = int_to_ptr.vmem [resolvable:$true] %s152
          %158 = dma.hbm_to_vmem [thread:$0]  %s151, 4096, %s153, %s140, 64, 64, 4
        $region24: #{tpu_custom_call.1} parent=19 // pred_fallthru
          _
      $region20: #{tpu_custom_call.1} parent=5 // pred_fallthru
        _
      %p159 = scmp.le.s32.totalorder 1, %s15
      %p160 = scmp.lt.s32.totalorder %s15, 5
      %p161 = pnand %p159, %p160
      %p162 = pneg %p161
      // Predicated region
      $region25: #{tpu_custom_call.1} parent=5 // pred_check
        _
      $region26: #{tpu_custom_call.1} parent=5 // pred_check_branch
        %164 = sbr.rel (%p161) target = $region28
      $region27: #{tpu_custom_call.1} parent=5 // pred_region
        %s165 = ssub.s32 %s15, 1
        %s166 = sand.u32 %s42, 1
        %s167 = scalar_lea.sflag [#allocation3], %s166
        %s168 = sand.u32 %s42, 1
        %s169 = smul.addr %s168, 256
        %s170 = scalar_lea.vmem [#allocation2], %s169
        // Predicated region
        $region29: #{tpu_custom_call.1} parent=27 // pred_check
          %p171 = pneg %p55
        $region30: #{tpu_custom_call.1} parent=27 // pred_check_branch
          %173 = sbr.rel (%p171) target = $region32
        $region31: #{tpu_custom_call.1} parent=27 // pred_region
          %174 = dma.done %s167, 4096
        $region32: #{tpu_custom_call.1} parent=27 // pred_fallthru
          _
        // Predicated region
        $region33: #{tpu_custom_call.1} parent=27 // pred_check
          %p175 = pneg %p76
        $region34: #{tpu_custom_call.1} parent=27 // pred_check_branch
          %177 = sbr.rel (%p175) target = $region36
        $region35: #{tpu_custom_call.1} parent=27 // pred_region
          %178 = dma.done [#allocation6], 1024
        $region36: #{tpu_custom_call.1} parent=27 // pred_fallthru
          _
        %s179 = sand.u32 %s42, 1
        %s180 = scalar_lea.sflag [#allocation3], %s179
        %s181 = sand.u32 %s42, 1
        %s182 = smul.addr %s181, 256
        %s183 = scalar_lea.vmem [#allocation2], %s182
        %p184 = pneg %p55
        %p185 = pneg %p52
        %p186 = pneg %p76
        %p187 = pneg %p73
        %p188 = pneg %p104
        %p189 = pneg %p101
        %s190 = sand.u32 %s91, 1
        %s191 = scalar_lea.sflag [#allocation4], %s190
        %s192 = sand.u32 %s91, 1
        %s193 = smul.addr %s192, 256
        %s194 = scalar_lea.vmem [#allocation7], %s193
        %s195 = smul.u32 64, %s25
        %s196 = smul.u32 64, %s25
        %v198 = vld [vmem:[%s170] sm:$0xf]
        %v199 = vld [vmem:[%s170 + $0x4] sm:$0xf]
        %v200 = vld [vmem:[%s170 + $0x8] sm:$0xf]
        %v201 = vld [vmem:[%s170 + $0xc] sm:$0xf]
        %v202 = vld [vmem:[%s170 + $0x10] sm:$0xf]
        %v203 = vld [vmem:[%s170 + $0x14] sm:$0xf]
        %v204 = vld [vmem:[%s170 + $0x18] sm:$0xf]
        %v205 = vld [vmem:[%s170 + $0x1c] sm:$0xf]
        %v206 = vld [vmem:[%s170 + $0x20] sm:$0xf]
        %v207 = vld [vmem:[%s170 + $0x24] sm:$0xf]
        %v208 = vld [vmem:[%s170 + $0x28] sm:$0xf]
        %v209 = vld [vmem:[%s170 + $0x2c] sm:$0xf]
        %v210 = vld [vmem:[%s170 + $0x30] sm:$0xf]
        %v211 = vld [vmem:[%s170 + $0x34] sm:$0xf]
        %v212 = vld [vmem:[%s170 + $0x38] sm:$0xf]
        %v213 = vld [vmem:[%s170 + $0x3c] sm:$0xf]
        %v214 = vld [vmem:[%s170 + $0x40] sm:$0xf]
        %v215 = vld [vmem:[%s170 + $0x44] sm:$0xf]
        %v216 = vld [vmem:[%s170 + $0x48] sm:$0xf]
        %v217 = vld [vmem:[%s170 + $0x4c] sm:$0xf]
        %v218 = vld [vmem:[%s170 + $0x50] sm:$0xf]
        %v219 = vld [vmem:[%s170 + $0x54] sm:$0xf]
        %v220 = vld [vmem:[%s170 + $0x58] sm:$0xf]
        %v221 = vld [vmem:[%s170 + $0x5c] sm:$0xf]
        %v222 = vld [vmem:[%s170 + $0x60] sm:$0xf]
        %v223 = vld [vmem:[%s170 + $0x64] sm:$0xf]
        %v224 = vld [vmem:[%s170 + $0x68] sm:$0xf]
        %v225 = vld [vmem:[%s170 + $0x6c] sm:$0xf]
        %v226 = vld [vmem:[%s170 + $0x70] sm:$0xf]
        %v227 = vld [vmem:[%s170 + $0x74] sm:$0xf]
        %v228 = vld [vmem:[%s170 + $0x78] sm:$0xf]
        %v229 = vld [vmem:[%s170 + $0x7c] sm:$0xf]
        %v230 = vld [vmem:[%s170 + $0x80] sm:$0xf]
        %v231 = vld [vmem:[%s170 + $0x84] sm:$0xf]
        %v232 = vld [vmem:[%s170 + $0x88] sm:$0xf]
        %v233 = vld [vmem:[%s170 + $0x8c] sm:$0xf]
        %v234 = vld [vmem:[%s170 + $0x90] sm:$0xf]
        %v235 = vld [vmem:[%s170 + $0x94] sm:$0xf]
        %v236 = vld [vmem:[%s170 + $0x98] sm:$0xf]
        %v237 = vld [vmem:[%s170 + $0x9c] sm:$0xf]
        %v238 = vld [vmem:[%s170 + $0xa0] sm:$0xf]
        %v239 = vld [vmem:[%s170 + $0xa4] sm:$0xf]
        %v240 = vld [vmem:[%s170 + $0xa8] sm:$0xf]
        %v241 = vld [vmem:[%s170 + $0xac] sm:$0xf]
        %v242 = vld [vmem:[%s170 + $0xb0] sm:$0xf]
        %v243 = vld [vmem:[%s170 + $0xb4] sm:$0xf]
        %v244 = vld [vmem:[%s170 + $0xb8] sm:$0xf]
        %v245 = vld [vmem:[%s170 + $0xbc] sm:$0xf]
        %v246 = vld [vmem:[%s170 + $0xc0] sm:$0xf]
        %v247 = vld [vmem:[%s170 + $0xc4] sm:$0xf]
        %v248 = vld [vmem:[%s170 + $0xc8] sm:$0xf]
        %v249 = vld [vmem:[%s170 + $0xcc] sm:$0xf]
        %v250 = vld [vmem:[%s170 + $0xd0] sm:$0xf]
        %v251 = vld [vmem:[%s170 + $0xd4] sm:$0xf]
        %v252 = vld [vmem:[%s170 + $0xd8] sm:$0xf]
        %v253 = vld [vmem:[%s170 + $0xdc] sm:$0xf]
        %v254 = vld [vmem:[%s170 + $0xe0] sm:$0xf]
        %v255 = vld [vmem:[%s170 + $0xe4] sm:$0xf]
        %v256 = vld [vmem:[%s170 + $0xe8] sm:$0xf]
        %v257 = vld [vmem:[%s170 + $0xec] sm:$0xf]
        %v258 = vld [vmem:[%s170 + $0xf0] sm:$0xf]
        %v259 = vld [vmem:[%s170 + $0xf4] sm:$0xf]
        %v260 = vld [vmem:[%s170 + $0xf8] sm:$0xf]
        %v261 = vld [vmem:[%s170 + $0xfc] sm:$0xf]
        %v262 = vld [vmem:[#allocation5] sm:$0xf]
        %v263 = vld [vmem:[#allocation5 + $0x4] sm:$0xf]
        %v264 = vld [vmem:[#allocation5 + $0x8] sm:$0xf]
        %v265 = vld [vmem:[#allocation5 + $0xc] sm:$0xf]
        %v266 = vld [vmem:[#allocation5 + $0x10] sm:$0xf]
        %v267 = vld [vmem:[#allocation5 + $0x14] sm:$0xf]
        %v268 = vld [vmem:[#allocation5 + $0x18] sm:$0xf]
        %v269 = vld [vmem:[#allocation5 + $0x1c] sm:$0xf]
        %v270 = vld [vmem:[#allocation5 + $0x20] sm:$0xf]
        %v271 = vld [vmem:[#allocation5 + $0x24] sm:$0xf]
        %v272 = vld [vmem:[#allocation5 + $0x28] sm:$0xf]
        %v273 = vld [vmem:[#allocation5 + $0x2c] sm:$0xf]
        %v274 = vld [vmem:[#allocation5 + $0x30] sm:$0xf]
        %v275 = vld [vmem:[#allocation5 + $0x34] sm:$0xf]
        %v276 = vld [vmem:[#allocation5 + $0x38] sm:$0xf]
        %v277 = vld [vmem:[#allocation5 + $0x3c] sm:$0xf]
        %v342 = vunpack.c.l.b16 %v198
        %v343 = vunpack.c.l.b16 %v199
        %v344 = vunpack.c.l.b16 %v200
        %v345 = vunpack.c.l.b16 %v201
        %v346 = vunpack.c.l.b16 %v202
        %v347 = vunpack.c.l.b16 %v203
        %v348 = vunpack.c.l.b16 %v204
        %v349 = vunpack.c.l.b16 %v205
        %v350 = vunpack.c.l.b16 %v206
        %v351 = vunpack.c.l.b16 %v207
        %v352 = vunpack.c.l.b16 %v208
        %v353 = vunpack.c.l.b16 %v209
        %v354 = vunpack.c.l.b16 %v210
        %v355 = vunpack.c.l.b16 %v211
        %v356 = vunpack.c.l.b16 %v212
        %v357 = vunpack.c.l.b16 %v213
        %v358 = vunpack.c.l.b16 %v214
        %v359 = vunpack.c.l.b16 %v215
        %v360 = vunpack.c.l.b16 %v216
        %v361 = vunpack.c.l.b16 %v217
        %v362 = vunpack.c.l.b16 %v218
        %v363 = vunpack.c.l.b16 %v219
        %v364 = vunpack.c.l.b16 %v220
        %v365 = vunpack.c.l.b16 %v221
        %v366 = vunpack.c.l.b16 %v222
        %v367 = vunpack.c.l.b16 %v223
        %v368 = vunpack.c.l.b16 %v224
        %v369 = vunpack.c.l.b16 %v225
        %v370 = vunpack.c.l.b16 %v226
        %v371 = vunpack.c.l.b16 %v227
        %v372 = vunpack.c.l.b16 %v228
        %v373 = vunpack.c.l.b16 %v229
        %v374 = vunpack.c.l.b16 %v230
        %v375 = vunpack.c.l.b16 %v231
        %v376 = vunpack.c.l.b16 %v232
        %v377 = vunpack.c.l.b16 %v233
        %v378 = vunpack.c.l.b16 %v234
        %v379 = vunpack.c.l.b16 %v235
        %v380 = vunpack.c.l.b16 %v236
        %v381 = vunpack.c.l.b16 %v237
        %v382 = vunpack.c.l.b16 %v238
        %v383 = vunpack.c.l.b16 %v239
        %v384 = vunpack.c.l.b16 %v240
        %v385 = vunpack.c.l.b16 %v241
        %v386 = vunpack.c.l.b16 %v242
        %v387 = vunpack.c.l.b16 %v243
        %v388 = vunpack.c.l.b16 %v244
        %v389 = vunpack.c.l.b16 %v245
        %v390 = vunpack.c.l.b16 %v246
        %v391 = vunpack.c.l.b16 %v247
        %v392 = vunpack.c.l.b16 %v248
        %v393 = vunpack.c.l.b16 %v249
        %v394 = vunpack.c.l.b16 %v250
        %v395 = vunpack.c.l.b16 %v251
        %v396 = vunpack.c.l.b16 %v252
        %v397 = vunpack.c.l.b16 %v253
        %v398 = vunpack.c.l.b16 %v254
        %v399 = vunpack.c.l.b16 %v255
        %v400 = vunpack.c.l.b16 %v256
        %v401 = vunpack.c.l.b16 %v257
        %v402 = vunpack.c.l.b16 %v258
        %v403 = vunpack.c.l.b16 %v259
        %v404 = vunpack.c.l.b16 %v260
        %v405 = vunpack.c.l.b16 %v261
        %v406 = vpack.c.b16 %v343, %v342
        %v407 = vpack.c.b16 %v345, %v344
        %v408 = vpack.c.b16 %v347, %v346
        %v409 = vpack.c.b16 %v349, %v348
        %v410 = vpack.c.b16 %v351, %v350
        %v411 = vpack.c.b16 %v353, %v352
        %v412 = vpack.c.b16 %v355, %v354
        %v413 = vpack.c.b16 %v357, %v356
        %v414 = vpack.c.b16 %v359, %v358
        %v415 = vpack.c.b16 %v361, %v360
        %v416 = vpack.c.b16 %v363, %v362
        %v417 = vpack.c.b16 %v365, %v364
        %v418 = vpack.c.b16 %v367, %v366
        %v419 = vpack.c.b16 %v369, %v368
        %v420 = vpack.c.b16 %v371, %v370
        %v421 = vpack.c.b16 %v373, %v372
        %v422 = vpack.c.b16 %v375, %v374
        %v423 = vpack.c.b16 %v377, %v376
        %v424 = vpack.c.b16 %v379, %v378
        %v425 = vpack.c.b16 %v381, %v380
        %v426 = vpack.c.b16 %v383, %v382
        %v427 = vpack.c.b16 %v385, %v384
        %v428 = vpack.c.b16 %v387, %v386
        %v429 = vpack.c.b16 %v389, %v388
        %v430 = vpack.c.b16 %v391, %v390
        %v431 = vpack.c.b16 %v393, %v392
        %v432 = vpack.c.b16 %v395, %v394
        %v433 = vpack.c.b16 %v397, %v396
        %v434 = vpack.c.b16 %v399, %v398
        %v435 = vpack.c.b16 %v401, %v400
        %v436 = vpack.c.b16 %v403, %v402
        %v437 = vpack.c.b16 %v405, %v404
        %v486 = vunpack.c.l.b16 %v262
        %v487 = vunpack.c.l.b16 %v263
        %v488 = vunpack.c.l.b16 %v264
        %v489 = vunpack.c.l.b16 %v265
        %v490 = vunpack.c.l.b16 %v266
        %v491 = vunpack.c.l.b16 %v267
        %v492 = vunpack.c.l.b16 %v268
        %v493 = vunpack.c.l.b16 %v269
        %v494 = vunpack.c.l.b16 %v270
        %v495 = vunpack.c.l.b16 %v271
        %v496 = vunpack.c.l.b16 %v272
        %v497 = vunpack.c.l.b16 %v273
        %v498 = vunpack.c.l.b16 %v274
        %v499 = vunpack.c.l.b16 %v275
        %v500 = vunpack.c.l.b16 %v276
        %v501 = vunpack.c.l.b16 %v277
        %v502 = vpack.c.b16 %v487, %v486
        %v503 = vpack.c.b16 %v489, %v488
        %v504 = vpack.c.b16 %v491, %v490
        %v505 = vpack.c.b16 %v493, %v492
        %v506 = vpack.c.b16 %v495, %v494
        %v507 = vpack.c.b16 %v497, %v496
        %v508 = vpack.c.b16 %v499, %v498
        %v509 = vpack.c.b16 %v501, %v500
        %518 = vmatprep.subr.bf16.mxu0 0
        %519 = vmatpush1.bf16.msra.mxu0 %v502
        %520 = vmatprep.subr.bf16.mxu0 0
        %521 = vmatpush1.bf16.msra.mxu0 %v503
        %522 = vmatprep.subr.bf16.mxu0 0
        %523 = vmatpush1.bf16.msra.mxu0 %v504
        %524 = vmatprep.subr.bf16.mxu0 0
        %525 = vmatpush1.bf16.msra.mxu0 %v505
        %526 = vmatprep.subr.bf16.mxu0 0
        %527 = vmatpush1.bf16.msra.mxu0 %v506
        %528 = vmatprep.subr.bf16.mxu0 0
        %529 = vmatpush1.bf16.msra.mxu0 %v507
        %530 = vmatprep.subr.bf16.mxu0 0
        %531 = vmatpush1.bf16.msra.mxu0 %v508
        %532 = vmatprep.subr.bf16.mxu0 0
        %533 = vmatpush1.bf16.msra.mxu0 %v509
        %534 = vmatprep.subr.bf16.mxu0 0
        %535 = vmatpush1.bf16.msra.mxu0 0
        %536 = vmatprep.subr.bf16.mxu0 0
        %537 = vmatpush1.bf16.msra.mxu0 0
        %538 = vmatprep.subr.bf16.mxu0 0
        %539 = vmatpush1.bf16.msra.mxu0 0
        %540 = vmatprep.subr.bf16.mxu0 0
        %541 = vmatpush1.bf16.msra.mxu0 0
        %542 = vmatprep.subr.bf16.mxu0 0
        %543 = vmatpush1.bf16.msra.mxu0 0
        %544 = vmatprep.subr.bf16.mxu0 0
        %545 = vmatpush1.bf16.msra.mxu0 0
        %546 = vmatprep.subr.bf16.mxu0 0
        %547 = vmatpush1.bf16.msra.mxu0 0
        %548 = vmatprep.subr.bf16.mxu0 0
        %549 = vmatpush1.bf16.msra.mxu0 0
        %550 = vmatprep.mubr.bf16.mxu0 0
        %551 = vmatmul.mubr.bf16.gmra.mrb[0].mxu0 %v406
        %v552 = vpop.f32.mrb[0].mxu0
        %v553 = vadd.f32 0.0, %v552
        %v554 = vpop.f32.mrb[0].mxu0
        %v555 = vpop.f32.mrb[0].mxu0
        %v556 = vadd.f32 0.0, %v555
        %v557 = vpop.f32.mrb[0].mxu0
        %558 = vmatprep.mubr.bf16.mxu0 0
        %559 = vmatmul.mubr.bf16.gmra.mrb[0].mxu0 %v407
        %v560 = vpop.f32.mrb[0].mxu0
        %v561 = vadd.f32 0.0, %v560
        %v562 = vpop.f32.mrb[0].mxu0
        %v563 = vpop.f32.mrb[0].mxu0
        %v564 = vadd.f32 0.0, %v563
        %v565 = vpop.f32.mrb[0].mxu0
        %566 = vmatprep.mubr.bf16.mxu0 0
        %567 = vmatmul.mubr.bf16.gmra.mrb[0].mxu0 %v408
        %v568 = vpop.f32.mrb[0].mxu0
        %v569 = vadd.f32 0.0, %v568
        %v570 = vpop.f32.mrb[0].mxu0
        %v571 = vpop.f32.mrb[0].mxu0
        %v572 = vadd.f32 0.0, %v571
        %v573 = vpop.f32.mrb[0].mxu0
        %574 = vmatprep.mubr.bf16.mxu0 0
        %575 = vmatmul.mubr.bf16.gmra.mrb[0].mxu0 %v409
        %v576 = vpop.f32.mrb[0].mxu0
        %v577 = vadd.f32 0.0, %v576
        %v578 = vpop.f32.mrb[0].mxu0
        %v579 = vpop.f32.mrb[0].mxu0
        %v580 = vadd.f32 0.0, %v579
        %v581 = vpop.f32.mrb[0].mxu0
        %582 = vmatprep.mubr.bf16.mxu0 0
        %583 = vmatmul.mubr.bf16.gmra.mrb[0].mxu0 %v410
        %v584 = vpop.f32.mrb[0].mxu0
        %v585 = vadd.f32 0.0, %v584
        %v586 = vpop.f32.mrb[0].mxu0
        %v587 = vpop.f32.mrb[0].mxu0
        %v588 = vadd.f32 0.0, %v587
        %v589 = vpop.f32.mrb[0].mxu0
        %590 = vmatprep.mubr.bf16.mxu0 0
        %591 = vmatmul.mubr.bf16.gmra.mrb[0].mxu0 %v411
        %v592 = vpop.f32.mrb[0].mxu0
        %v593 = vadd.f32 0.0, %v592
        %v594 = vpop.f32.mrb[0].mxu0
        %v595 = vpop.f32.mrb[0].mxu0
        %v596 = vadd.f32 0.0, %v595
        %v597 = vpop.f32.mrb[0].mxu0
        %598 = vmatprep.mubr.bf16.mxu0 0
        %599 = vmatmul.mubr.bf16.gmra.mrb[0].mxu0 %v412
        %v600 = vpop.f32.mrb[0].mxu0
        %v601 = vadd.f32 0.0, %v600
        %v602 = vpop.f32.mrb[0].mxu0
        %v603 = vpop.f32.mrb[0].mxu0
        %v604 = vadd.f32 0.0, %v603
        %v605 = vpop.f32.mrb[0].mxu0
        %606 = vmatprep.mubr.bf16.mxu0 0
        %607 = vmatmul.mubr.bf16.gmra.mrb[0].mxu0 %v413
        %v608 = vpop.f32.mrb[0].mxu0
        %v609 = vadd.f32 0.0, %v608
        %v610 = vpop.f32.mrb[0].mxu0
        %v611 = vpop.f32.mrb[0].mxu0
        %v612 = vadd.f32 0.0, %v611
        %v613 = vpop.f32.mrb[0].mxu0
        %614 = vmatprep.mubr.bf16.mxu0 0
        %615 = vmatmul.mubr.bf16.gmra.mrb[0].mxu0 %v414
        %v616 = vpop.f32.mrb[0].mxu0
        %v617 = vadd.f32 0.0, %v616
        %v618 = vpop.f32.mrb[0].mxu0
        %v619 = vpop.f32.mrb[0].mxu0
        %v620 = vadd.f32 0.0, %v619
        %v621 = vpop.f32.mrb[0].mxu0
        %622 = vmatprep.mubr.bf16.mxu0 0
        %623 = vmatmul.mubr.bf16.gmra.mrb[0].mxu0 %v415
        %v624 = vpop.f32.mrb[0].mxu0
        %v625 = vadd.f32 0.0, %v624
        %v626 = vpop.f32.mrb[0].mxu0
        %v627 = vpop.f32.mrb[0].mxu0
        %v628 = vadd.f32 0.0, %v627
        %v629 = vpop.f32.mrb[0].mxu0
        %630 = vmatprep.mubr.bf16.mxu0 0
        %631 = vmatmul.mubr.bf16.gmra.mrb[0].mxu0 %v416
        %v632 = vpop.f32.mrb[0].mxu0
        %v633 = vadd.f32 0.0, %v632
        %v634 = vpop.f32.mrb[0].mxu0
        %v635 = vpop.f32.mrb[0].mxu0
        %v636 = vadd.f32 0.0, %v635
        %v637 = vpop.f32.mrb[0].mxu0
        %638 = vmatprep.mubr.bf16.mxu0 0
        %639 = vmatmul.mubr.bf16.gmra.mrb[0].mxu0 %v417
        %v640 = vpop.f32.mrb[0].mxu0
        %v641 = vadd.f32 0.0, %v640
        %v642 = vpop.f32.mrb[0].mxu0
        %v643 = vpop.f32.mrb[0].mxu0
        %v644 = vadd.f32 0.0, %v643
        %v645 = vpop.f32.mrb[0].mxu0
        %646 = vmatprep.mubr.bf16.mxu0 0
        %647 = vmatmul.mubr.bf16.gmra.mrb[0].mxu0 %v418
        %v648 = vpop.f32.mrb[0].mxu0
        %v649 = vadd.f32 0.0, %v648
        %v650 = vpop.f32.mrb[0].mxu0
        %v651 = vpop.f32.mrb[0].mxu0
        %v652 = vadd.f32 0.0, %v651
        %v653 = vpop.f32.mrb[0].mxu0
        %654 = vmatprep.mubr.bf16.mxu0 0
        %655 = vmatmul.mubr.bf16.gmra.mrb[0].mxu0 %v419
        %v656 = vpop.f32.mrb[0].mxu0
        %v657 = vadd.f32 0.0, %v656
        %v658 = vpop.f32.mrb[0].mxu0
        %v659 = vpop.f32.mrb[0].mxu0
        %v660 = vadd.f32 0.0, %v659
        %v661 = vpop.f32.mrb[0].mxu0
        %662 = vmatprep.mubr.bf16.mxu0 0
        %663 = vmatmul.mubr.bf16.gmra.mrb[0].mxu0 %v420
        %v664 = vpop.f32.mrb[0].mxu0
        %v665 = vadd.f32 0.0, %v664
        %v666 = vpop.f32.mrb[0].mxu0
        %v667 = vpop.f32.mrb[0].mxu0
        %v668 = vadd.f32 0.0, %v667
        %v669 = vpop.f32.mrb[0].mxu0
        %670 = vmatprep.mubr.bf16.mxu0 0
        %671 = vmatmul.mubr.bf16.gmra.mrb[0].mxu0 %v421
        %v672 = vpop.f32.mrb[0].mxu0
        %v673 = vadd.f32 0.0, %v672
        %v674 = vpop.f32.mrb[0].mxu0
        %v675 = vpop.f32.mrb[0].mxu0
        %v676 = vadd.f32 0.0, %v675
        %v677 = vpop.f32.mrb[0].mxu0
        %678 = vmatprep.mubr.bf16.mxu0 0
        %679 = vmatmul.mubr.bf16.gmra.mrb[0].mxu0 %v422
        %v680 = vpop.f32.mrb[0].mxu0
        %v681 = vadd.f32 0.0, %v680
        %v682 = vpop.f32.mrb[0].mxu0
        %v683 = vpop.f32.mrb[0].mxu0
        %v684 = vadd.f32 0.0, %v683
        %v685 = vpop.f32.mrb[0].mxu0
        %686 = vmatprep.mubr.bf16.mxu0 0
        %687 = vmatmul.mubr.bf16.gmra.mrb[0].mxu0 %v423
        %v688 = vpop.f32.mrb[0].mxu0
        %v689 = vadd.f32 0.0, %v688
        %v690 = vpop.f32.mrb[0].mxu0
        %v691 = vpop.f32.mrb[0].mxu0
        %v692 = vadd.f32 0.0, %v691
        %v693 = vpop.f32.mrb[0].mxu0
        %694 = vmatprep.mubr.bf16.mxu0 0
        %695 = vmatmul.mubr.bf16.gmra.mrb[0].mxu0 %v424
        %v696 = vpop.f32.mrb[0].mxu0
        %v697 = vadd.f32 0.0, %v696
        %v698 = vpop.f32.mrb[0].mxu0
        %v699 = vpop.f32.mrb[0].mxu0
        %v700 = vadd.f32 0.0, %v699
        %v701 = vpop.f32.mrb[0].mxu0
        %702 = vmatprep.mubr.bf16.mxu0 0
        %703 = vmatmul.mubr.bf16.gmra.mrb[0].mxu0 %v425
        %v704 = vpop.f32.mrb[0].mxu0
        %v705 = vadd.f32 0.0, %v704
        %v706 = vpop.f32.mrb[0].mxu0
        %v707 = vpop.f32.mrb[0].mxu0
        %v708 = vadd.f32 0.0, %v707
        %v709 = vpop.f32.mrb[0].mxu0
        %710 = vmatprep.mubr.bf16.mxu0 0
        %711 = vmatmul.mubr.bf16.gmra.mrb[0].mxu0 %v426
        %v712 = vpop.f32.mrb[0].mxu0
        %v713 = vadd.f32 0.0, %v712
        %v714 = vpop.f32.mrb[0].mxu0
        %v715 = vpop.f32.mrb[0].mxu0
        %v716 = vadd.f32 0.0, %v715
        %v717 = vpop.f32.mrb[0].mxu0
        %718 = vmatprep.mubr.bf16.mxu0 0
        %719 = vmatmul.mubr.bf16.gmra.mrb[0].mxu0 %v427
        %v720 = vpop.f32.mrb[0].mxu0
        %v721 = vadd.f32 0.0, %v720
        %v722 = vpop.f32.mrb[0].mxu0
        %v723 = vpop.f32.mrb[0].mxu0
        %v724 = vadd.f32 0.0, %v723
        %v725 = vpop.f32.mrb[0].mxu0
        %726 = vmatprep.mubr.bf16.mxu0 0
        %727 = vmatmul.mubr.bf16.gmra.mrb[0].mxu0 %v428
        %v728 = vpop.f32.mrb[0].mxu0
        %v729 = vadd.f32 0.0, %v728
        %v730 = vpop.f32.mrb[0].mxu0
        %v731 = vpop.f32.mrb[0].mxu0
        %v732 = vadd.f32 0.0, %v731
        %v733 = vpop.f32.mrb[0].mxu0
        %734 = vmatprep.mubr.bf16.mxu0 0
        %735 = vmatmul.mubr.bf16.gmra.mrb[0].mxu0 %v429
        %v736 = vpop.f32.mrb[0].mxu0
        %v737 = vadd.f32 0.0, %v736
        %v738 = vpop.f32.mrb[0].mxu0
        %v739 = vpop.f32.mrb[0].mxu0
        %v740 = vadd.f32 0.0, %v739
        %v741 = vpop.f32.mrb[0].mxu0
        %742 = vmatprep.mubr.bf16.mxu0 0
        %743 = vmatmul.mubr.bf16.gmra.mrb[0].mxu0 %v430
        %v744 = vpop.f32.mrb[0].mxu0
        %v745 = vadd.f32 0.0, %v744
        %v746 = vpop.f32.mrb[0].mxu0
        %v747 = vpop.f32.mrb[0].mxu0
        %v748 = vadd.f32 0.0, %v747
        %v749 = vpop.f32.mrb[0].mxu0
        %750 = vmatprep.mubr.bf16.mxu0 0
        %751 = vmatmul.mubr.bf16.gmra.mrb[0].mxu0 %v431
        %v752 = vpop.f32.mrb[0].mxu0
        %v753 = vadd.f32 0.0, %v752
        %v754 = vpop.f32.mrb[0].mxu0
        %v755 = vpop.f32.mrb[0].mxu0
        %v756 = vadd.f32 0.0, %v755
        %v757 = vpop.f32.mrb[0].mxu0
        %758 = vmatprep.mubr.bf16.mxu0 0
        %759 = vmatmul.mubr.bf16.gmra.mrb[0].mxu0 %v432
        %v760 = vpop.f32.mrb[0].mxu0
        %v761 = vadd.f32 0.0, %v760
        %v762 = vpop.f32.mrb[0].mxu0
        %v763 = vpop.f32.mrb[0].mxu0
        %v764 = vadd.f32 0.0, %v763
        %v765 = vpop.f32.mrb[0].mxu0
        %766 = vmatprep.mubr.bf16.mxu0 0
        %767 = vmatmul.mubr.bf16.gmra.mrb[0].mxu0 %v433
        %v768 = vpop.f32.mrb[0].mxu0
        %v769 = vadd.f32 0.0, %v768
        %v770 = vpop.f32.mrb[0].mxu0
        %v771 = vpop.f32.mrb[0].mxu0
        %v772 = vadd.f32 0.0, %v771
        %v773 = vpop.f32.mrb[0].mxu0
        %774 = vmatprep.mubr.bf16.mxu0 0
        %775 = vmatmul.mubr.bf16.gmra.mrb[0].mxu0 %v434
        %v776 = vpop.f32.mrb[0].mxu0
        %v777 = vadd.f32 0.0, %v776
        %v778 = vpop.f32.mrb[0].mxu0
        %v779 = vpop.f32.mrb[0].mxu0
        %v780 = vadd.f32 0.0, %v779
        %v781 = vpop.f32.mrb[0].mxu0
        %782 = vmatprep.mubr.bf16.mxu0 0
        %783 = vmatmul.mubr.bf16.gmra.mrb[0].mxu0 %v435
        %v784 = vpop.f32.mrb[0].mxu0
        %v785 = vadd.f32 0.0, %v784
        %v786 = vpop.f32.mrb[0].mxu0
        %v787 = vpop.f32.mrb[0].mxu0
        %v788 = vadd.f32 0.0, %v787
        %v789 = vpop.f32.mrb[0].mxu0
        %790 = vmatprep.mubr.bf16.mxu0 0
        %791 = vmatmul.mubr.bf16.gmra.mrb[0].mxu0 %v436
        %v792 = vpop.f32.mrb[0].mxu0
        %v793 = vadd.f32 0.0, %v792
        %v794 = vpop.f32.mrb[0].mxu0
        %v795 = vpop.f32.mrb[0].mxu0
        %v796 = vadd.f32 0.0, %v795
        %v797 = vpop.f32.mrb[0].mxu0
        %798 = vmatprep.mubr.bf16.mxu0 0
        %799 = vmatmul.mubr.bf16.gmra.mrb[0].mxu0 %v437
        %v800 = vpop.f32.mrb[0].mxu0
        %v801 = vadd.f32 0.0, %v800
        %v802 = vpop.f32.mrb[0].mxu0
        %v803 = vpop.f32.mrb[0].mxu0
        %v804 = vadd.f32 0.0, %v803
        %v805 = vpop.f32.mrb[0].mxu0
        %806 = vdwg.mxu0
        %v807 = vpack.c.bf16 %v556, %v553
        %v808 = vpack.c.bf16 %v564, %v561
        %v809 = vpack.c.bf16 %v572, %v569
        %v810 = vpack.c.bf16 %v580, %v577
        %v811 = vpack.c.bf16 %v588, %v585
        %v812 = vpack.c.bf16 %v596, %v593
        %v813 = vpack.c.bf16 %v604, %v601
        %v814 = vpack.c.bf16 %v612, %v609
        %v815 = vpack.c.bf16 %v620, %v617
        %v816 = vpack.c.bf16 %v628, %v625
        %v817 = vpack.c.bf16 %v636, %v633
        %v818 = vpack.c.bf16 %v644, %v641
        %v819 = vpack.c.bf16 %v652, %v649
        %v820 = vpack.c.bf16 %v660, %v657
        %v821 = vpack.c.bf16 %v668, %v665
        %v822 = vpack.c.bf16 %v676, %v673
        %v823 = vpack.c.bf16 %v684, %v681
        %v824 = vpack.c.bf16 %v692, %v689
        %v825 = vpack.c.bf16 %v700, %v697
        %v826 = vpack.c.bf16 %v708, %v705
        %v827 = vpack.c.bf16 %v716, %v713
        %v828 = vpack.c.bf16 %v724, %v721
        %v829 = vpack.c.bf16 %v732, %v729
        %v830 = vpack.c.bf16 %v740, %v737
        %v831 = vpack.c.bf16 %v748, %v745
        %v832 = vpack.c.bf16 %v756, %v753
        %v833 = vpack.c.bf16 %v764, %v761
        %v834 = vpack.c.bf16 %v772, %v769
        %v835 = vpack.c.bf16 %v780, %v777
        %v836 = vpack.c.bf16 %v788, %v785
        %v837 = vpack.c.bf16 %v796, %v793
        %v838 = vpack.c.bf16 %v804, %v801
        %v871 = vunpack.c.l.b16 %v807
        %v872 = vunpack.c.h.b16 %v807
        %v873 = vunpack.c.l.b16 %v808
        %v874 = vunpack.c.h.b16 %v808
        %v875 = vunpack.c.l.b16 %v809
        %v876 = vunpack.c.h.b16 %v809
        %v877 = vunpack.c.l.b16 %v810
        %v878 = vunpack.c.h.b16 %v810
        %v879 = vunpack.c.l.b16 %v811
        %v880 = vunpack.c.h.b16 %v811
        %v881 = vunpack.c.l.b16 %v812
        %v882 = vunpack.c.h.b16 %v812
        %v883 = vunpack.c.l.b16 %v813
        %v884 = vunpack.c.h.b16 %v813
        %v885 = vunpack.c.l.b16 %v814
        %v886 = vunpack.c.h.b16 %v814
        %v887 = vunpack.c.l.b16 %v815
        %v888 = vunpack.c.h.b16 %v815
        %v889 = vunpack.c.l.b16 %v816
        %v890 = vunpack.c.h.b16 %v816
        %v891 = vunpack.c.l.b16 %v817
        %v892 = vunpack.c.h.b16 %v817
        %v893 = vunpack.c.l.b16 %v818
        %v894 = vunpack.c.h.b16 %v818
        %v895 = vunpack.c.l.b16 %v819
        %v896 = vunpack.c.h.b16 %v819
        %v897 = vunpack.c.l.b16 %v820
        %v898 = vunpack.c.h.b16 %v820
        %v899 = vunpack.c.l.b16 %v821
        %v900 = vunpack.c.h.b16 %v821
        %v901 = vunpack.c.l.b16 %v822
        %v902 = vunpack.c.h.b16 %v822
        %v903 = vunpack.c.l.b16 %v823
        %v904 = vunpack.c.h.b16 %v823
        %v905 = vunpack.c.l.b16 %v824
        %v906 = vunpack.c.h.b16 %v824
        %v907 = vunpack.c.l.b16 %v825
        %v908 = vunpack.c.h.b16 %v825
        %v909 = vunpack.c.l.b16 %v826
        %v910 = vunpack.c.h.b16 %v826
        %v911 = vunpack.c.l.b16 %v827
        %v912 = vunpack.c.h.b16 %v827
        %v913 = vunpack.c.l.b16 %v828
        %v914 = vunpack.c.h.b16 %v828
        %v915 = vunpack.c.l.b16 %v829
        %v916 = vunpack.c.h.b16 %v829
        %v917 = vunpack.c.l.b16 %v830
        %v918 = vunpack.c.h.b16 %v830
        %v919 = vunpack.c.l.b16 %v831
        %v920 = vunpack.c.h.b16 %v831
        %v921 = vunpack.c.l.b16 %v832
        %v922 = vunpack.c.h.b16 %v832
        %v923 = vunpack.c.l.b16 %v833
        %v924 = vunpack.c.h.b16 %v833
        %v925 = vunpack.c.l.b16 %v834
        %v926 = vunpack.c.h.b16 %v834
        %v927 = vunpack.c.l.b16 %v835
        %v928 = vunpack.c.h.b16 %v835
        %v929 = vunpack.c.l.b16 %v836
        %v930 = vunpack.c.h.b16 %v836
        %v931 = vunpack.c.l.b16 %v837
        %v932 = vunpack.c.h.b16 %v837
        %v933 = vunpack.c.l.b16 %v838
        %v934 = vunpack.c.h.b16 %v838
        %v935 = vpack.c.b16 %v871, %v871
        %v936 = vpack.c.b16 %v872, %v872
        %v937 = vpack.c.b16 %v873, %v873
        %v938 = vpack.c.b16 %v874, %v874
        %v939 = vpack.c.b16 %v875, %v875
        %v940 = vpack.c.b16 %v876, %v876
        %v941 = vpack.c.b16 %v877, %v877
        %v942 = vpack.c.b16 %v878, %v878
        %v943 = vpack.c.b16 %v879, %v879
        %v944 = vpack.c.b16 %v880, %v880
        %v945 = vpack.c.b16 %v881, %v881
        %v946 = vpack.c.b16 %v882, %v882
        %v947 = vpack.c.b16 %v883, %v883
        %v948 = vpack.c.b16 %v884, %v884
        %v949 = vpack.c.b16 %v885, %v885
        %v950 = vpack.c.b16 %v886, %v886
        %v951 = vpack.c.b16 %v887, %v887
        %v952 = vpack.c.b16 %v888, %v888
        %v953 = vpack.c.b16 %v889, %v889
        %v954 = vpack.c.b16 %v890, %v890
        %v955 = vpack.c.b16 %v891, %v891
        %v956 = vpack.c.b16 %v892, %v892
        %v957 = vpack.c.b16 %v893, %v893
        %v958 = vpack.c.b16 %v894, %v894
        %v959 = vpack.c.b16 %v895, %v895
        %v960 = vpack.c.b16 %v896, %v896
        %v961 = vpack.c.b16 %v897, %v897
        %v962 = vpack.c.b16 %v898, %v898
        %v963 = vpack.c.b16 %v899, %v899
        %v964 = vpack.c.b16 %v900, %v900
        %v965 = vpack.c.b16 %v901, %v901
        %v966 = vpack.c.b16 %v902, %v902
        %v967 = vpack.c.b16 %v903, %v903
        %v968 = vpack.c.b16 %v904, %v904
        %v969 = vpack.c.b16 %v905, %v905
        %v970 = vpack.c.b16 %v906, %v906
        %v971 = vpack.c.b16 %v907, %v907
        %v972 = vpack.c.b16 %v908, %v908
        %v973 = vpack.c.b16 %v909, %v909
        %v974 = vpack.c.b16 %v910, %v910
        %v975 = vpack.c.b16 %v911, %v911
        %v976 = vpack.c.b16 %v912, %v912
        %v977 = vpack.c.b16 %v913, %v913
        %v978 = vpack.c.b16 %v914, %v914
        %v979 = vpack.c.b16 %v915, %v915
        %v980 = vpack.c.b16 %v916, %v916
        %v981 = vpack.c.b16 %v917, %v917
        %v982 = vpack.c.b16 %v918, %v918
        %v983 = vpack.c.b16 %v919, %v919
        %v984 = vpack.c.b16 %v920, %v920
        %v985 = vpack.c.b16 %v921, %v921
        %v986 = vpack.c.b16 %v922, %v922
        %v987 = vpack.c.b16 %v923, %v923
        %v988 = vpack.c.b16 %v924, %v924
        %v989 = vpack.c.b16 %v925, %v925
        %v990 = vpack.c.b16 %v926, %v926
        %v991 = vpack.c.b16 %v927, %v927
        %v992 = vpack.c.b16 %v928, %v928
        %v993 = vpack.c.b16 %v929, %v929
        %v994 = vpack.c.b16 %v930, %v930
        %v995 = vpack.c.b16 %v931, %v931
        %v996 = vpack.c.b16 %v932, %v932
        %v997 = vpack.c.b16 %v933, %v933
        %v998 = vpack.c.b16 %v934, %v934
        %1063 = vst [vmem:[%s194] sm:$0xf] %v935
        %1064 = vst [vmem:[%s194 + $0x4] sm:$0xf] %v936
        %1065 = vst [vmem:[%s194 + $0x8] sm:$0xf] %v937
        %1066 = vst [vmem:[%s194 + $0xc] sm:$0xf] %v938
        %1067 = vst [vmem:[%s194 + $0x10] sm:$0xf] %v939
        %1068 = vst [vmem:[%s194 + $0x14] sm:$0xf] %v940
        %1069 = vst [vmem:[%s194 + $0x18] sm:$0xf] %v941
        %1070 = vst [vmem:[%s194 + $0x1c] sm:$0xf] %v942
        %1071 = vst [vmem:[%s194 + $0x20] sm:$0xf] %v943
        %1072 = vst [vmem:[%s194 + $0x24] sm:$0xf] %v944
        %1073 = vst [vmem:[%s194 + $0x28] sm:$0xf] %v945
        %1074 = vst [vmem:[%s194 + $0x2c] sm:$0xf] %v946
        %1075 = vst [vmem:[%s194 + $0x30] sm:$0xf] %v947
        %1076 = vst [vmem:[%s194 + $0x34] sm:$0xf] %v948
        %1077 = vst [vmem:[%s194 + $0x38] sm:$0xf] %v949
        %1078 = vst [vmem:[%s194 + $0x3c] sm:$0xf] %v950
        %1079 = vst [vmem:[%s194 + $0x40] sm:$0xf] %v951
        %1080 = vst [vmem:[%s194 + $0x44] sm:$0xf] %v952
        %1081 = vst [vmem:[%s194 + $0x48] sm:$0xf] %v953
        %1082 = vst [vmem:[%s194 + $0x4c] sm:$0xf] %v954
        %1083 = vst [vmem:[%s194 + $0x50] sm:$0xf] %v955
        %1084 = vst [vmem:[%s194 + $0x54] sm:$0xf] %v956
        %1085 = vst [vmem:[%s194 + $0x58] sm:$0xf] %v957
        %1086 = vst [vmem:[%s194 + $0x5c] sm:$0xf] %v958
        %1087 = vst [vmem:[%s194 + $0x60] sm:$0xf] %v959
        %1088 = vst [vmem:[%s194 + $0x64] sm:$0xf] %v960
        %1089 = vst [vmem:[%s194 + $0x68] sm:$0xf] %v961
        %1090 = vst [vmem:[%s194 + $0x6c] sm:$0xf] %v962
        %1091 = vst [vmem:[%s194 + $0x70] sm:$0xf] %v963
        %1092 = vst [vmem:[%s194 + $0x74] sm:$0xf] %v964
        %1093 = vst [vmem:[%s194 + $0x78] sm:$0xf] %v965
        %1094 = vst [vmem:[%s194 + $0x7c] sm:$0xf] %v966
        %1095 = vst [vmem:[%s194 + $0x80] sm:$0xf] %v967
        %1096 = vst [vmem:[%s194 + $0x84] sm:$0xf] %v968
        %1097 = vst [vmem:[%s194 + $0x88] sm:$0xf] %v969
        %1098 = vst [vmem:[%s194 + $0x8c] sm:$0xf] %v970
        %1099 = vst [vmem:[%s194 + $0x90] sm:$0xf] %v971
        %1100 = vst [vmem:[%s194 + $0x94] sm:$0xf] %v972
        %1101 = vst [vmem:[%s194 + $0x98] sm:$0xf] %v973
        %1102 = vst [vmem:[%s194 + $0x9c] sm:$0xf] %v974
        %1103 = vst [vmem:[%s194 + $0xa0] sm:$0xf] %v975
        %1104 = vst [vmem:[%s194 + $0xa4] sm:$0xf] %v976
        %1105 = vst [vmem:[%s194 + $0xa8] sm:$0xf] %v977
        %1106 = vst [vmem:[%s194 + $0xac] sm:$0xf] %v978
        %1107 = vst [vmem:[%s194 + $0xb0] sm:$0xf] %v979
        %1108 = vst [vmem:[%s194 + $0xb4] sm:$0xf] %v980
        %1109 = vst [vmem:[%s194 + $0xb8] sm:$0xf] %v981
        %1110 = vst [vmem:[%s194 + $0xbc] sm:$0xf] %v982
        %1111 = vst [vmem:[%s194 + $0xc0] sm:$0xf] %v983
        %1112 = vst [vmem:[%s194 + $0xc4] sm:$0xf] %v984
        %1113 = vst [vmem:[%s194 + $0xc8] sm:$0xf] %v985
        %1114 = vst [vmem:[%s194 + $0xcc] sm:$0xf] %v986
        %1115 = vst [vmem:[%s194 + $0xd0] sm:$0xf] %v987
        %1116 = vst [vmem:[%s194 + $0xd4] sm:$0xf] %v988
        %1117 = vst [vmem:[%s194 + $0xd8] sm:$0xf] %v989
        %1118 = vst [vmem:[%s194 + $0xdc] sm:$0xf] %v990
        %1119 = vst [vmem:[%s194 + $0xe0] sm:$0xf] %v991
        %1120 = vst [vmem:[%s194 + $0xe4] sm:$0xf] %v992
        %1121 = vst [vmem:[%s194 + $0xe8] sm:$0xf] %v993
        %1122 = vst [vmem:[%s194 + $0xec] sm:$0xf] %v994
        %1123 = vst [vmem:[%s194 + $0xf0] sm:$0xf] %v995
        %1124 = vst [vmem:[%s194 + $0xf4] sm:$0xf] %v996
        %1125 = vst [vmem:[%s194 + $0xf8] sm:$0xf] %v997
        %1126 = vst [vmem:[%s194 + $0xfc] sm:$0xf] %v998
        %s1127 = sand.u32 %s91, 1
        %s1128 = scalar_lea.sflag [#allocation4], %s1127
        %s1129 = sand.u32 %s91, 1
        %s1130 = smul.addr %s1129, 256
        %s1131 = scalar_lea.vmem [#allocation7], %s1130
        // Predicated region
        $region37: #{tpu_custom_call.1} parent=27 // pred_check
          %p1132 = pneg %p101
        $region38: #{tpu_custom_call.1} parent=27 // pred_check_branch
          %1134 = sbr.rel (%p1132) target = $region40
        $region39: #{tpu_custom_call.1} parent=27 // pred_region
          %s1135 = smul.u32 64, %s25
          %s1137 = ssub.s32 4096, 4096
          %1138 = vsyncadd %s1128, %s1137
          %s1139 = smul.addr %s24, 64
          %s1140 = sadd.s32 %s1135, %s1139
          %s1141 = smul.addr %s1140, 64
          %s1142 = scalar_lea.hbm %s2, %s1141
          %s1143 = sshll.u32 %s1131, 4
          %s1144 = int_to_ptr.vmem [resolvable:$true] %s1143
          %1149 = dma.vmem_to_hbm [thread:$0]  %s1144, 4096, %s1142, %s1128, 64, 64, 4
        $region40: #{tpu_custom_call.1} parent=27 // pred_fallthru
          _
      $region28: #{tpu_custom_call.1} parent=5 // pred_fallthru
        _
      %p1150 = scmp.le.s32.totalorder 2, %s15
      // Predicated region
      $region41: #{tpu_custom_call.1} parent=5 // pred_check
        %p1151 = pneg %p1150
      $region42: #{tpu_custom_call.1} parent=5 // pred_check_branch
        %1153 = sbr.rel (%p1151) target = $region44
      $region43: #{tpu_custom_call.1} parent=5 // pred_region
        %s1154 = ssub.s32 %s15, 2
        // Predicated region
        $region45: #{tpu_custom_call.1} parent=43 // pred_check
          %p1155 = pneg %p107
        $region46: #{tpu_custom_call.1} parent=43 // pred_check_branch
          %1157 = sbr.rel (%p1155) target = $region48
        $region47: #{tpu_custom_call.1} parent=43 // pred_region
          %s1158 = sand.u32 %s92, 1
          %s1159 = scalar_lea.sflag [#allocation4], %s1158
          %s1160 = sand.u32 %s92, 1
          %s1161 = smul.addr %s1160, 256
          %s1162 = scalar_lea.vmem [#allocation7], %s1161
          %1163 = dma.done %s1159, 4096
        $region48: #{tpu_custom_call.1} parent=43 // pred_fallthru
          _
      $region44: #{tpu_custom_call.1} parent=5 // pred_fallthru
        _
    $region6: #{tpu_custom_call.1} parent=1 // loop_footer
      %s19 = sadd.s32 1, %s15
    $region7: #{tpu_custom_call.1} parent=1 // loop_footer_branch
      %14 = sbr.rel target = $region3
    $region8: #{tpu_custom_call.1} parent=1 // loop_exit
      _
    %1164 = vsyncpa [#allocation3], 1
    %s1165 = scalar_lea.sflag [#allocation3], 1
    %1166 = vsyncpa %s1165, 1
    %1167 = vsyncpa [#allocation6], 1
    %1168 = vsyncpa [#allocation4], 1
    %s1169 = scalar_lea.sflag [#allocation4], 1
    %1170 = vsyncpa %s1169, 1

</llo_original>
